<compile_context>
chip_gen: v5e
topology: v5e:2x2
jax: 0.10.0
libtpu: 0.0.40
codegen_flags: <defaults>
</compile_context>

<pallas_src>
import functools
import math

import jax
import jax.numpy as jnp
from jax.experimental import pallas as pl
from jax.experimental.pallas import tpu as pltpu

_VMEM = pltpu.MemorySpace.VMEM


# ----------------------- traced math helpers (run inside kernels) -----------
def _atan_nonneg(x):
    """atan(x) for x >= 0 (Cephes atanf polynomial, f32 accuracy)."""
    big = x > 2.414213562373095        # tan(3*pi/8)
    mid = x > 0.4142135623730951       # tan(pi/8)
    x_big = -pl.reciprocal(jnp.maximum(x, 1e-30), approx=True)
    x_mid = (x - 1.0) * pl.reciprocal(x + 1.0, approx=True)
    xr = jnp.where(big, x_big, jnp.where(mid, x_mid, x))
    off = jnp.where(big, 0.5 * math.pi, jnp.where(mid, 0.25 * math.pi, 0.0))
    z = xr * xr
    p = (((8.05374449538e-2 * z - 1.38776856032e-1) * z + 1.99777106478e-1) * z
         - 3.33329491539e-1) * z * xr + xr
    return off + p


def _qmul(q1, q2):
    x1, y1, z1, w1 = q1
    x2, y2, z2, w2 = q2
    return (w1 * x2 + x1 * w2 + y1 * z2 - z1 * y2,
            w1 * y2 - x1 * z2 + y1 * w2 + z1 * x2,
            w1 * z2 + x1 * y2 - y1 * x2 + z1 * w2,
            w1 * w2 - x1 * x2 - y1 * y2 - z1 * z2)


def _qrot(q, v):
    x, y, z, w = q
    vx, vy, vz = v
    tx = 2.0 * (y * vz - z * vy)
    ty = 2.0 * (z * vx - x * vz)
    tz = 2.0 * (x * vy - y * vx)
    return (vx + w * tx + (y * tz - z * ty),
            vy + w * ty + (z * tx - x * tz),
            vz + w * tz + (x * ty - y * tx))


def _se3_mul(a, b):
    (ta, qa), (tb, qb) = a, b
    rt = _qrot(qa, tb)
    return ((ta[0] + rt[0], ta[1] + rt[1], ta[2] + rt[2]), _qmul(qa, qb))


def _se3_inv(a):
    t, q = a
    qi = (-q[0], -q[1], -q[2], q[3])
    rt = _qrot(qi, t)
    return ((-rt[0], -rt[1], -rt[2]), qi)


def _se3_log(a):
    """SE3 log map -> (tau, phi), lietorch convention (EPS = 1e-6)."""
    (tx, ty, tz), (x, y, z, w) = a
    n2 = x * x + y * y + z * z
    n = jnp.sqrt(n2)
    abs_w = jnp.abs(w)
    sign_w = jnp.where(w > 0.0, 1.0, -1.0)
    small_n = n2 < 1e-12                         # lietorch: squared_n < EPS^2
    tiny_w = abs_w < 1e-6                        # lietorch: |w| < EPS
    safe_n = jnp.where(small_n, 1.0, n)
    inv_n = pl.reciprocal(safe_n, approx=True)
    # main branch: 2*atan(n/w)/n  ==  sign(w) * 2*atan(n/|w|)/n
    atan_v = _atan_nonneg(n * pl.reciprocal(jnp.maximum(abs_w, 1e-30), approx=True))
    s = sign_w * 2.0 * atan_v * inv_n
    s = jnp.where(tiny_w, sign_w * math.pi * inv_n, s)
    # small-rotation Taylor tail: 2/w - (2/3) * n^2 / w^3
    w_safe = jnp.where(abs_w < 1e-12, 1.0, w)
    inv_w = pl.reciprocal(w_safe, approx=True)
    s_small = 2.0 * inv_w - (2.0 / 3.0) * n2 * inv_w * inv_w * inv_w
    s = jnp.where(small_n, s_small, s)
    px, py, pz = s * x, s * y, s * z             # phi
    theta2 = px * px + py * py + pz * pz
    theta = jnp.sqrt(theta2)
    # Vinv coefficient: (1 - 0.5*theta*cot(theta/2)) / theta^2 with
    # cot(theta/2) == |w|/n (exact for theta = 2*atan(n/|w|)); 1/12 tail.
    small_t = theta2 < 1e-6                      # lietorch: theta2 < EPS
    inv_t2 = pl.reciprocal(jnp.where(small_t, 1.0, theta2), approx=True)
    coef = jnp.where(small_t, 1.0 / 12.0,
                     (1.0 - 0.5 * theta * abs_w * inv_n) * inv_t2)
    # tau = Vinv(phi) @ t = t - 0.5*(phi x t) + coef*(phi x (phi x t))
    c1x = py * tz - pz * ty
    c1y = pz * tx - px * tz
    c1z = px * ty - py * tx
    c2x = py * c1z - pz * c1y
    c2y = pz * c1x - px * c1z
    c2z = px * c1y - py * c1x
    tau = (tx - 0.5 * c1x + coef * c2x,
           ty - 0.5 * c1y + coef * c2y,
           tz - 0.5 * c1z + coef * c2z)
    return tau, (px, py, pz)


# ----------------------- loss terms (on loaded (B, C) tiles) -----------------
def _col(a, i):
    return a[:, i:i + 1]                          # (B, 1) static lane slice


def _geo_terms(pred_t, pred_q, g):
    """rotation_loss_GEO with Ps = SE3([identity, prediction]).

    pred_t: (B,3), pred_q: (B,4) raw, g: (B,14) = [G0 t q | G1 t q]."""
    B = pred_t.shape[0]
    pt = (_col(pred_t, 0), _col(pred_t, 1), _col(pred_t, 2))
    qx, qy, qz, qw = (_col(pred_q, i) for i in range(4))
    # norm_Quaternion: q / max(||q||, 0.01)
    inv_qn = pl.reciprocal(
        jnp.maximum(jnp.sqrt(qx * qx + qy * qy + qz * qz + qw * qw), 0.01),
        approx=True)
    pred = (pt, (qx * inv_qn, qy * inv_qn, qz * inv_qn, qw * inv_qn))
    G0 = ((_col(g, 0), _col(g, 1), _col(g, 2)),
          (_col(g, 3), _col(g, 4), _col(g, 5), _col(g, 6)))
    G1 = ((_col(g, 7), _col(g, 8), _col(g, 9)),
          (_col(g, 10), _col(g, 11), _col(g, 12), _col(g, 13)))
    # dP = [pred, pred.inv()] since Ps[:,0] is the identity pose.
    pred_inv = _se3_inv(pred)
    tau0, phi0 = _se3_log(_se3_mul(_se3_mul(G1, _se3_inv(G0)), pred_inv))
    tau1, phi1 = _se3_log(_se3_mul(_se3_mul(G0, _se3_inv(G1)), pred))
    vnorm = lambda v: jnp.sqrt(v[0] * v[0] + v[1] * v[1] + v[2] * v[2])
    inv_2b = 1.0 / (2.0 * B)
    tr = (jnp.sum(vnorm(tau0)) + jnp.sum(vnorm(tau1))) * inv_2b
    rot = (jnp.sum(vnorm(phi0)) + jnp.sum(vnorm(phi1))) * inv_2b
    return rot, tr


def _metric_term(f1, f2, tgt, scale):
    """Metric_learning: contrastive margin loss on feature distance."""
    diff = f1 - f2 + 1e-6                          # torch pairwise_distance eps
    row = jnp.sqrt(jnp.sum(diff * diff, axis=1, keepdims=True))     # (B, 1)
    distance = jnp.sum(row) * (1.0 / f1.shape[0])
    t = tgt[:, 0:3]
    q = tgt[:, 3:7]
    margin = jnp.sqrt(jnp.sum(t * t)) + jnp.sqrt(jnp.sum(q * q))
    return jnp.maximum(scale * margin - distance, 0.0) * (1.0 / 20000.0)


def _mse_term(pred_t, pred_q, tgt):
    dt = pred_t - tgt[:, 0:3]
    dq = pred_q - tgt[:, 3:7]
    return (jnp.sum(dt * dt) * (1.0 / dt.size)
            + jnp.sum(dq * dq) * (1.0 / dq.size))


# ------------------------------ Pallas kernels -------------------------------
def _mse_kernel(pred_t_ref, pred_q_ref, tgt_ref, out_ref):
    total = _mse_term(pred_t_ref[...], pred_q_ref[...], tgt_ref[...])
    out_ref[...] = jnp.broadcast_to(total, (1, 1))


def _geo_kernel(pred_t_ref, pred_q_ref, pose_ref, out_ref):
    rot, tr = _geo_terms(pred_t_ref[...], pred_q_ref[...], pose_ref[...])
    out_ref[...] = jnp.broadcast_to(rot + tr, (1, 1))


def _geo_metric_kernel(pred_t_ref, pred_q_ref, pose_ref, f1_ref, f2_ref,
                       tgt_ref, out_ref, *, scale):
    rot, tr = _geo_terms(pred_t_ref[...], pred_q_ref[...], pose_ref[...])
    ml = _metric_term(f1_ref[...], f2_ref[...], tgt_ref[...], scale)
    out_ref[...] = jnp.broadcast_to(rot + tr + ml, (1, 1))


# ------------------------------ wrappers --------------------------------------
def _scalar_pallas_call(kernel, *args):
    # TODO(synk): if B / feature dims ever grow large, add a batch grid with
    # dimension_semantics=("parallel",) and a pl.when-guarded accumulator so
    # v7x's two TensorCores both do work and VMEM stays bounded.
    out = pl.pallas_call(
        kernel,
        out_shape=jax.ShapeDtypeStruct((1, 1), jnp.float32),
        in_specs=[pl.BlockSpec(memory_space=_VMEM)] * len(args),
        out_specs=pl.BlockSpec(memory_space=_VMEM),
    )(*args)
    return out[0, 0]


def mse_pose_loss(pred_t, pred_q, tgt):
    return _scalar_pallas_call(_mse_kernel, pred_t, pred_q, tgt)


def geodesic_loss(pred_t, pred_q, pose2):
    return _scalar_pallas_call(_geo_kernel, pred_t, pred_q, pose2)


def geo_metric_loss(pred_t, pred_q, pose2, feat1, feat2, tgt, scale):
    kernel = functools.partial(_geo_metric_kernel, scale=float(scale))
    return _scalar_pallas_call(kernel, pred_t, pred_q, pose2, feat1, feat2, tgt)


class LossesPallas:
    """JAX/Pallas port of model/loss.py::losses (module has no learned params)."""

    def __init__(self, scale_af):
        self.scale = float(scale_af)

    def __call__(self, feat1, feat2, pred_q, pred_t, target, Pose, loss_type):
        f32 = jnp.float32
        B = pred_t.shape[0]
        pred_t = pred_t.astype(f32)
        pred_q = pred_q.astype(f32)
        tgt = target.reshape(B, target.shape[-1]).astype(f32)     # target.squeeze(1)
        if loss_type == 0:
            return mse_pose_loss(pred_t, pred_q, tgt)
        # (B, 2, 7) -> (B, 14): contiguous reshape, [G0 t q | G1 t q] per row.
        pose2 = Pose.reshape(B, Pose.shape[1] * Pose.shape[2]).astype(f32)
        if loss_type == 1:
            return geodesic_loss(pred_t, pred_q, pose2)
        if loss_type == 2:
            return geo_metric_loss(pred_t, pred_q, pose2,
                                   feat1.astype(f32), feat2.astype(f32),
                                   tgt, self.scale)
        raise ValueError("loss_type must be 0, 1 or 2")


if __name__ == "__main__":
    B, F = 2, 32
    key = jax.random.PRNGKey(0)
    k = jax.random.split(key, 7)

    feat1 = jax.random.normal(k[0], (B, F), jnp.float32)
    feat2 = jax.random.normal(k[1], (B, F), jnp.float32)
    pred_q = jax.random.normal(k[2], (B, 4), jnp.float32)
    pred_t = jax.random.normal(k[3], (B, 3), jnp.float32) * 0.1
    target = jax.random.normal(k[4], (B, 1, 7), jnp.float32)

    # ground-truth pose pair per sample: (B, 2, 7) = [tx,ty,tz, qx,qy,qz,qw]
    pose_t = jax.random.normal(k[5], (B, 2, 3), jnp.float32) * 0.5
    qraw = jax.random.normal(k[6], (B, 2, 4), jnp.float32)
    pose_q = qraw / jnp.linalg.norm(qraw, axis=-1, keepdims=True)
    Pose = jnp.concatenate([pose_t, pose_q], axis=-1)

    model = LossesPallas(scale_af=1.0)
    out0 = model(feat1, feat2, pred_q, pred_t, target, Pose, loss_type=0)
    out1 = model(feat1, feat2, pred_q, pred_t, target, Pose, loss_type=1)
    out2 = model(feat1, feat2, pred_q, pred_t, target, Pose, loss_type=2)
    jax.block_until_ready((out0, out1, out2))
    print("KERNEL_OK")
</pallas_src>

<mosaic_0001>
module attributes {stable_mosaic.version = 11 : i64} {
  func.func @_mse_kernel(%arg0: memref<2x3xf32, #tpu.memory_space<vmem>>, %arg1: memref<2x4xf32, #tpu.memory_space<vmem>>, %arg2: memref<2x7xf32, #tpu.memory_space<vmem>>, %arg3: memref<1x1xf32, #tpu.memory_space<vmem>>) attributes {dimension_semantics = [], scalar_prefetch = 0 : i64, scratch_operands = 0 : i64, tpu.core_type = #tpu.core_type<tc>} {
    %c0 = arith.constant 0 : index
    %c0_0 = arith.constant 0 : index
    %0 = vector.load %arg0[%c0, %c0_0] : memref<2x3xf32, #tpu.memory_space<vmem>>, vector<2x3xf32>
    %c0_1 = arith.constant 0 : index
    %c0_2 = arith.constant 0 : index
    %1 = vector.load %arg1[%c0_1, %c0_2] : memref<2x4xf32, #tpu.memory_space<vmem>>, vector<2x4xf32>
    %c0_3 = arith.constant 0 : index
    %c0_4 = arith.constant 0 : index
    %2 = vector.load %arg2[%c0_3, %c0_4] : memref<2x7xf32, #tpu.memory_space<vmem>>, vector<2x7xf32>
    %3 = vector.extract_strided_slice %2 {offsets = [0, 0], sizes = [2, 3], strides = [1, 1]} : vector<2x7xf32> to vector<2x3xf32>
    %4 = arith.subf %0, %3 : vector<2x3xf32>
    %5 = vector.extract_strided_slice %2 {offsets = [0, 3], sizes = [2, 4], strides = [1, 1]} : vector<2x7xf32> to vector<2x4xf32>
    %6 = arith.subf %1, %5 : vector<2x4xf32>
    %7 = arith.mulf %4, %4 : vector<2x3xf32>
    %8 = vector.shape_cast %7 : vector<2x3xf32> to vector<1x2x3xf32>
    %cst = arith.constant dense<0.000000e+00> : vector<1xf32>
    %9 = vector.multi_reduction <add>, %8, %cst [1, 2] : vector<1x2x3xf32> to vector<1xf32>
    %10 = vector.shape_cast %9 : vector<1xf32> to vector<1x1x1xf32>
    %11 = vector.extract %10[0, 0, 0] : f32 from vector<1x1x1xf32>
    %cst_5 = arith.constant 0.166666672 : f32
    %12 = arith.mulf %11, %cst_5 : f32
    %13 = arith.mulf %6, %6 : vector<2x4xf32>
    %14 = vector.shape_cast %13 : vector<2x4xf32> to vector<1x2x4xf32>
    %cst_6 = arith.constant dense<0.000000e+00> : vector<1xf32>
    %15 = vector.multi_reduction <add>, %14, %cst_6 [1, 2] : vector<1x2x4xf32> to vector<1xf32>
    %16 = vector.shape_cast %15 : vector<1xf32> to vector<1x1x1xf32>
    %17 = vector.extract %16[0, 0, 0] : f32 from vector<1x1x1xf32>
    %cst_7 = arith.constant 1.250000e-01 : f32
    %18 = arith.mulf %17, %cst_7 : f32
    %19 = arith.addf %12, %18 : f32
    %20 = vector.broadcast %19 : f32 to vector<1x1xf32>
    %c0_8 = arith.constant 0 : index
    %c0_9 = arith.constant 0 : index
    %21 = vector.load %arg3[%c0_8, %c0_9] : memref<1x1xf32, #tpu.memory_space<vmem>>, vector<1x1xf32>
    tpu.vector_store %arg3[%c0_8, %c0_9], %20 {strides = array<i32>} : memref<1x1xf32, #tpu.memory_space<vmem>>, vector<1x1xf32>,
    return
  }
}

</mosaic_0001>

<llo_original>
// kernel: tpu_custom_call.1
$region0: #{tpu_custom_call.1}
  #allocation0 [shape = 'u32[]', space=smem, size = 0x4, offset = 0x4, fixed_abs, tag = 'smem constant byte address 0x4 - core index']
  #allocation1 [shape = 'u32[72,128]{1,0:T(1,128)}', space=vmem, size = 0x9000, scoped, tag = 'internal scratch']
  %s0 = inlined_call_operand.hbm [shape: f32[2,3], index: 0, kind: input, shape index: {}]
  %s1 = inlined_call_operand.hbm [shape: f32[2,4], index: 1, kind: input, shape index: {}]
  %s2 = inlined_call_operand.hbm [shape: f32[2,7], index: 2, kind: input, shape index: {}]
  %s3 = inlined_call_operand.hbm [shape: f32[1,1], index: 3, kind: output, shape index: {}]
  %s4 = sld [smem:[#allocation0]]
  $region34: #{tpu_custom_call.1} parent=0
    _
  %s6 = ssub.s32 1, %s4
  %s7 = scalar_select 0, %s6, %s4
  $region1: #{tpu_custom_call.1} parent=0
    #allocation2 [shape = 'u8[1024]{0}', space=vmem, size = 0x400, scoped, tag = 'input window, operand 0, single buffered']
    #allocation3 [shape = 's32[1]{0}', space=sflag, size = 0x4, scoped, tag = 'scoped memory for tpu_custom_call.1']
    #allocation4 [shape = 's32[1]{0}', space=sflag, size = 0x4, scoped, tag = 'scoped memory for tpu_custom_call.1']
    #allocation5 [shape = 'u8[1024]{0}', space=vmem, size = 0x400, scoped, tag = 'input window, operand 1, single buffered']
    #allocation6 [shape = 's32[1]{0}', space=sflag, size = 0x4, scoped, tag = 'scoped memory for tpu_custom_call.1']
    #allocation7 [shape = 'u8[1024]{0}', space=vmem, size = 0x400, scoped, tag = 'input window, operand 2, single buffered']
    #allocation8 [shape = 'u8[512]{0}', space=vmem, size = 0x400, scoped, tag = 'output window, operand 0, single buffered']
    %8 = vsyncpa [#allocation3], 0
    %9 = vsyncpa [#allocation6], 0
    %10 = vsyncpa [#allocation4], 0
    // Predicated region
    $region2: #{tpu_custom_call.1} parent=1 // pred_check
      _
    $region3: #{tpu_custom_call.1} parent=1 // pred_check_branch
      %12 = sbr.rel (0) target = $region5
    $region4: #{tpu_custom_call.1} parent=1 // pred_region
      %14 = vsyncadd [#allocation3], 0
      %s16 = sshll.u32 %s0, 4
      %s17 = int_to_ptr.hbm [resolvable:$true] %s16
      %s18 = sshll.u32 [#allocation2], 4
      %s19 = int_to_ptr.vmem [resolvable:$true] %s18
      %21 = dma.hbm_to_vmem [thread:$0]  %s17, 32, %s19, [#allocation3]
    $region5: #{tpu_custom_call.1} parent=1 // pred_fallthru
      _
    // Predicated region
    $region6: #{tpu_custom_call.1} parent=1 // pred_check
      _
    $region7: #{tpu_custom_call.1} parent=1 // pred_check_branch
      %23 = sbr.rel (0) target = $region9
    $region8: #{tpu_custom_call.1} parent=1 // pred_region
      %25 = vsyncadd [#allocation6], 0
      %s27 = sshll.u32 %s1, 4
      %s28 = int_to_ptr.hbm [resolvable:$true] %s27
      %s29 = sshll.u32 [#allocation5], 4
      %s30 = int_to_ptr.vmem [resolvable:$true] %s29
      %32 = dma.hbm_to_vmem [thread:$0]  %s28, 32, %s30, [#allocation6]
    $region9: #{tpu_custom_call.1} parent=1 // pred_fallthru
      _
    // Predicated region
    $region10: #{tpu_custom_call.1} parent=1 // pred_check
      _
    $region11: #{tpu_custom_call.1} parent=1 // pred_check_branch
      %34 = sbr.rel (0) target = $region13
    $region12: #{tpu_custom_call.1} parent=1 // pred_region
      %36 = vsyncadd [#allocation6], 0
      %s38 = sshll.u32 %s2, 4
      %s39 = int_to_ptr.hbm [resolvable:$true] %s38
      %s40 = sshll.u32 [#allocation7], 4
      %s41 = int_to_ptr.vmem [resolvable:$true] %s40
      %43 = dma.hbm_to_vmem [thread:$0]  %s39, 32, %s41, [#allocation6]
    $region13: #{tpu_custom_call.1} parent=1 // pred_fallthru
      _
    // Predicated region
    $region14: #{tpu_custom_call.1} parent=1 // pred_check
      _
    $region15: #{tpu_custom_call.1} parent=1 // pred_check_branch
      %45 = sbr.rel (0) target = $region17
    $region16: #{tpu_custom_call.1} parent=1 // pred_region
      %47 = dma.done [#allocation3], 32
    $region17: #{tpu_custom_call.1} parent=1 // pred_fallthru
      _
    // Predicated region
    $region18: #{tpu_custom_call.1} parent=1 // pred_check
      _
    $region19: #{tpu_custom_call.1} parent=1 // pred_check_branch
      %49 = sbr.rel (0) target = $region21
    $region20: #{tpu_custom_call.1} parent=1 // pred_region
      %51 = dma.done [#allocation6], 32
    $region21: #{tpu_custom_call.1} parent=1 // pred_fallthru
      _
    // Predicated region
    $region22: #{tpu_custom_call.1} parent=1 // pred_check
      _
    $region23: #{tpu_custom_call.1} parent=1 // pred_check_branch
      %53 = sbr.rel (0) target = $region25
    $region24: #{tpu_custom_call.1} parent=1 // pred_region
      %55 = dma.done [#allocation6], 32
    $region25: #{tpu_custom_call.1} parent=1 // pred_fallthru
      _
    %v56 = vld [vmem:[#allocation2] sm:$0x3]
    %v57 = vld [vmem:[#allocation5] sm:$0x3]
    %v58 = vld [vmem:[#allocation7] sm:$0x3]
    %v59 = vsub.f32 %v56, %v58
    %61 = vrot.lane.b32.xlu0 %v58, 125
    %v62 = vpop.permute.xlu0 %61
    %v64 = vsub.f32 %v57, %v62
    %v65 = vmul.f32 %v59, %v59
    %vm66 = vcmask 17408
    %v67 = vsel %vm66, %v65, 0.0
    %68 = vadd.xlane.f32.xlu0 %v67
    %v69 = vpop.xlane.xlu0 %68
    %v70 = vrot.slane %v69, 4
    %v71 = vadd.f32 %v69, %v70
    %v72 = vrot.slane %v71, 2
    %v73 = vadd.f32 %v71, %v72
    %v74 = vrot.slane %v73, 1
    %v75 = vadd.f32 %v73, %v74
    %s76 = vtos %v75
    %s77 = smul.f32 %s76, 0.16666667
    %v78 = vmul.f32 %v64, %v64
    %vm79 = vcmask 25600
    %v80 = vsel %vm79, %v78, 0.0
    %81 = vadd.xlane.f32.xlu0 %v80
    %v82 = vpop.xlane.xlu0 %81
    %v83 = vrot.slane %v82, 4
    %v84 = vadd.f32 %v82, %v83
    %v85 = vrot.slane %v84, 2
    %v86 = vadd.f32 %v84, %v85
    %v87 = vrot.slane %v86, 1
    %v88 = vadd.f32 %v86, %v87
    %s89 = vtos %v88
    %s90 = smul.f32 %s89, 0.125
    %s91 = sadd.f32 %s77, %s90
    %v92 = vstv %s91
    %vm93 = vcmask 0
    %94 = vst.msk [vmem:[#allocation8] sm:$0x1] %vm93, %v92
    // Predicated region
    $region26: #{tpu_custom_call.1} parent=1 // pred_check
      _
    $region27: #{tpu_custom_call.1} parent=1 // pred_check_branch
      %96 = sbr.rel (0) target = $region29
    $region28: #{tpu_custom_call.1} parent=1 // pred_region
      %98 = vsyncadd [#allocation4], 0
      %s100 = sshll.u32 [#allocation8], 4
      %s101 = int_to_ptr.vmem [resolvable:$true] %s100
      %s102 = sshll.u32 %s3, 4
      %s103 = int_to_ptr.hbm [resolvable:$true] %s102
      %105 = dma.vmem_to_hbm [thread:$0]  %s101, 16, %s103, [#allocation4]
    $region29: #{tpu_custom_call.1} parent=1 // pred_fallthru
      _
    // Predicated region
    $region30: #{tpu_custom_call.1} parent=1 // pred_check
      _
    $region31: #{tpu_custom_call.1} parent=1 // pred_check_branch
      %107 = sbr.rel (0) target = $region33
    $region32: #{tpu_custom_call.1} parent=1 // pred_region
      %109 = dma.done [#allocation4], 16
    $region33: #{tpu_custom_call.1} parent=1 // pred_fallthru
      _
    %110 = vsyncpa [#allocation3], 1
    %111 = vsyncpa [#allocation6], 1
    %112 = vsyncpa [#allocation4], 1

</llo_original>
